<compile_context>
chip_gen: v5e
topology: v5e:2x2
jax: 0.10.0
libtpu: 0.0.40
codegen_flags: <defaults>
</compile_context>

<pallas_src>
import math

import jax
import jax.numpy as jnp
from jax.experimental import pallas as pl
from jax.experimental.pallas import tpu as pltpu


def _heaveside_kernel(x_ref, p_ref, o_ref):
    # x_ref: (tile_rows, lanes) in x dtype; p_ref: (6, lanes) float32.
    xf = x_ref[...].astype(jnp.float32)          # one cast, reused by all compares
    p = p_ref[...]
    a1, a2, a3 = p[0:1, :], p[1:2, :], p[2:3, :]
    b1, b2, b3 = p[3:4, :], p[4:5, :], p[5:6, :]

    # select instead of (cmp -> cast -> mul); `x > b` instead of `x - b > 0`
    # drops three full-block subtracts (VALU) per element.
    acc = jnp.where(xf > b1, a1, 0.0)
    acc = acc + jnp.where(xf > b2, a2, 0.0)
    acc = acc + jnp.where(xf > b3, a3, 0.0)

    # single cast after the f32 sum (matches the torch reference semantics).
    o_ref[...] = acc.astype(o_ref.dtype)


def _chip_defaults():
    """(target_block_bytes, vmem_limit_bytes, two_tensorcores) per chip gen."""
    kind = ""
    try:
        kind = jax.devices()[0].device_kind.lower()
    except Exception:
        pass
    if "v7" in kind or "7x" in kind:
        # 2 in-bufs + 2 out-bufs @ 8 MiB = 32 MiB, inside v7x's 64 MiB VMEM.
        return 8 << 20, 48 << 20, True
    if "v6" in kind:
        return 4 << 20, 32 << 20, False
    # v5e / unknown: slower HBM already hides per-step overhead at 2 MiB.
    return 2 << 20, 32 << 20, False


def param_heaveside_forward(x, alpha1, alpha2, alpha3, beta1, beta2, beta3,
                            *, target_block_bytes=None, vmem_limit_bytes=None):
    """x: (..., size). Params: (size,) each. Returns same shape/dtype as x."""
    size = x.shape[-1]
    orig_shape = x.shape
    orig_dtype = x.dtype

    blk_default, vmem_default, two_tc = _chip_defaults()
    if target_block_bytes is None:
        target_block_bytes = blk_default
    if vmem_limit_bytes is None:
        vmem_limit_bytes = vmem_default

    x2d = x.reshape(-1, size)
    rows = x2d.shape[0]
    itemsize = jnp.dtype(orig_dtype).itemsize

    # --- lane-dense layout: lanes = lcm(size, 128), always a 128-multiple ----
    lane_fold = 128 // math.gcd(size, 128)
    lanes = size * lane_fold

    # Pad only to a multiple of lane_fold (< 128 extra rows, usually zero) so
    # the fold reshape is legal.  No pad to a whole-block multiple.
    pad_rows = (-rows) % lane_fold
    if pad_rows:
        x2d = jnp.pad(x2d, ((0, pad_rows), (0, 0)))
    folded_total = (rows + pad_rows) // lane_fold
    x_f = x2d.reshape(folded_total, lanes)

    # --- pick the row tile (~target_block_bytes per block) -------------------
    row_bytes = lanes * itemsize
    tile_rows = max(8, (int(target_block_bytes) // max(row_bytes, 1)) // 8 * 8)

    min_steps = 4 if two_tc else 1  # keep both v7x TensorCores double-buffering
    if tile_rows >= folded_total:
        if min_steps > 1 and folded_total > 8 * min_steps:
            tile_rows = max(
                8, (((folded_total + min_steps - 1) // min_steps) + 7) // 8 * 8)
        else:
            # Single full-extent block (block dim == array dim is always legal);
            # on 1-TC chips splitting a tiny input only adds step overhead.
            tile_rows = folded_total
    grid = ((folded_total + tile_rows - 1) // tile_rows,)

    # --- single stacked, lane-tiled parameter block ---------------------------
    params = jnp.stack(
        [alpha1, alpha2, alpha3, beta1, beta2, beta3]).astype(jnp.float32)
    if lane_fold > 1:
        params = jnp.tile(params, (1, lane_fold))  # (6, lanes); lane j -> ch j % size

    out_f = pl.pallas_call(
        _heaveside_kernel,
        out_shape=jax.ShapeDtypeStruct((folded_total, lanes), orig_dtype),
        grid_spec=pltpu.PrefetchScalarGridSpec(
            num_scalar_prefetch=0,
            grid=grid,
            in_specs=[
                pl.BlockSpec((tile_rows, lanes), lambda i: (i, 0)),
                pl.BlockSpec((6, lanes), lambda i: (0, 0)),
            ],
            out_specs=pl.BlockSpec((tile_rows, lanes), lambda i: (i, 0)),
        ),
        compiler_params=pltpu.CompilerParams(
            dimension_semantics=("parallel",),
            vmem_limit_bytes=int(vmem_limit_bytes),
        ),
    )(x_f, params)

    out2d = out_f.reshape(folded_total * lane_fold, size)
    if pad_rows:
        out2d = out2d[:rows]
    return out2d.reshape(orig_shape)


if __name__ == "__main__":
    # Module shapes: params are [size]; x broadcasts against them -> (batch, seq, size).
    batch, seq, size = 2, 8, 32
    key = jax.random.PRNGKey(0)
    kx, k2, k3, k5, k6 = jax.random.split(key, 5)

    x = jax.random.normal(kx, (batch, seq, size), dtype=jnp.float32)

    # Deterministic parameter init mirroring __init__:
    zero_point1 = jnp.zeros((size,), jnp.float32)
    zero_point2 = jax.random.uniform(k2, (size,), jnp.float32)
    zero_point3 = jax.random.uniform(k3, (size,), jnp.float32)
    embed_scale1 = jnp.ones((size,), jnp.float32)
    embed_scale2 = jax.random.uniform(k5, (size,), jnp.float32)
    embed_scale3 = jax.random.uniform(k6, (size,), jnp.float32)

    out = param_heaveside_forward(
        x, embed_scale1, embed_scale2, embed_scale3,
        zero_point1, zero_point2, zero_point3)
    out = jax.block_until_ready(out)

    # Reference (plain JAX) check of forward semantics.
    def ref_one(a, b):
        return a * (x - b > 0).astype(jnp.float32)
    ref = (ref_one(embed_scale1, zero_point1)
           + ref_one(embed_scale2, zero_point2)
           + ref_one(embed_scale3, zero_point3)).astype(x.dtype)
    assert out.shape == x.shape and out.dtype == x.dtype
    assert jnp.allclose(out, ref, atol=1e-6), "mismatch vs reference"

    # Also exercise an awkward channel size + non-divisible row count
    # (ragged last block, lane_fold > 1) to cover the lane-dense path.
    size2 = 48
    rows2 = 37
    x2 = jax.random.normal(jax.random.PRNGKey(1), (rows2, size2), jnp.float32)
    a_1 = jnp.ones((size2,), jnp.float32)
    a_2 = jax.random.uniform(jax.random.PRNGKey(2), (size2,), jnp.float32)
    a_3 = jax.random.uniform(jax.random.PRNGKey(3), (size2,), jnp.float32)
    b_1 = jnp.zeros((size2,), jnp.float32)
    b_2 = jax.random.uniform(jax.random.PRNGKey(4), (size2,), jnp.float32)
    b_3 = jax.random.uniform(jax.random.PRNGKey(5), (size2,), jnp.float32)
    out2 = jax.block_until_ready(
        param_heaveside_forward(x2, a_1, a_2, a_3, b_1, b_2, b_3))
    ref2 = (a_1 * (x2 - b_1 > 0) + a_2 * (x2 - b_2 > 0)
            + a_3 * (x2 - b_3 > 0)).astype(x2.dtype)
    assert jnp.allclose(out2, ref2, atol=1e-6), "mismatch vs reference (size=48)"

    print("KERNEL_OK")
</pallas_src>

<mosaic_0001>
module attributes {stable_mosaic.version = 11 : i64} {
  func.func @_heaveside_kernel(%arg0: i32, %arg1: memref<4x128xf32, #tpu.memory_space<vmem>>, %arg2: memref<6x128xf32, #tpu.memory_space<vmem>>, %arg3: memref<4x128xf32, #tpu.memory_space<vmem>>) attributes {dimension_semantics = [#tpu.dimension_semantics<parallel>], iteration_bounds = array<i64: 1>, scalar_prefetch = 0 : i64, scratch_operands = 0 : i64, tpu.core_type = #tpu.core_type<tc>, window_params = [{transform_indices = @transform_0, window_bounds = array<i64: 4, 128>}, {pipeline_mode = #tpu.pipeline_mode<synchronous>, transform_indices = @transform_1, window_bounds = array<i64: 6, 128>}, {transform_indices = @transform_2, window_bounds = array<i64: 4, 128>}]} {
    %c0 = arith.constant 0 : index
    %c0_0 = arith.constant 0 : index
    %0 = vector.load %arg1[%c0, %c0_0] : memref<4x128xf32, #tpu.memory_space<vmem>>, vector<4x128xf32>
    %c0_1 = arith.constant 0 : index
    %c0_2 = arith.constant 0 : index
    %1 = vector.load %arg2[%c0_1, %c0_2] : memref<6x128xf32, #tpu.memory_space<vmem>>, vector<6x128xf32>
    %2 = vector.extract_strided_slice %1 {offsets = [0, 0], sizes = [1, 128], strides = [1, 1]} : vector<6x128xf32> to vector<1x128xf32>
    %3 = vector.extract_strided_slice %1 {offsets = [1, 0], sizes = [1, 128], strides = [1, 1]} : vector<6x128xf32> to vector<1x128xf32>
    %4 = vector.extract_strided_slice %1 {offsets = [2, 0], sizes = [1, 128], strides = [1, 1]} : vector<6x128xf32> to vector<1x128xf32>
    %5 = vector.extract_strided_slice %1 {offsets = [3, 0], sizes = [1, 128], strides = [1, 1]} : vector<6x128xf32> to vector<1x128xf32>
    %6 = vector.extract_strided_slice %1 {offsets = [4, 0], sizes = [1, 128], strides = [1, 1]} : vector<6x128xf32> to vector<1x128xf32>
    %7 = vector.extract_strided_slice %1 {offsets = [5, 0], sizes = [1, 128], strides = [1, 1]} : vector<6x128xf32> to vector<1x128xf32>
    %8 = vector.broadcast %5 : vector<1x128xf32> to vector<4x128xf32>
    %9 = arith.cmpf ogt, %0, %8 : vector<4x128xf32>
    %cst = arith.constant 0.000000e+00 : f32
    %10 = vector.shape_cast %2 : vector<1x128xf32> to vector<1x128xf32>
    %11 = vector.broadcast %10 : vector<1x128xf32> to vector<4x128xf32>
    %12 = vector.broadcast %cst : f32 to vector<4x128xf32>
    %13 = arith.select %9, %11, %12 : vector<4x128xi1>, vector<4x128xf32>
    %14 = vector.broadcast %6 : vector<1x128xf32> to vector<4x128xf32>
    %15 = arith.cmpf ogt, %0, %14 : vector<4x128xf32>
    %cst_3 = arith.constant 0.000000e+00 : f32
    %16 = vector.shape_cast %3 : vector<1x128xf32> to vector<1x128xf32>
    %17 = vector.broadcast %16 : vector<1x128xf32> to vector<4x128xf32>
    %18 = vector.broadcast %cst_3 : f32 to vector<4x128xf32>
    %19 = arith.select %15, %17, %18 : vector<4x128xi1>, vector<4x128xf32>
    %20 = arith.addf %13, %19 : vector<4x128xf32>
    %21 = vector.broadcast %7 : vector<1x128xf32> to vector<4x128xf32>
    %22 = arith.cmpf ogt, %0, %21 : vector<4x128xf32>
    %cst_4 = arith.constant 0.000000e+00 : f32
    %23 = vector.shape_cast %4 : vector<1x128xf32> to vector<1x128xf32>
    %24 = vector.broadcast %23 : vector<1x128xf32> to vector<4x128xf32>
    %25 = vector.broadcast %cst_4 : f32 to vector<4x128xf32>
    %26 = arith.select %22, %24, %25 : vector<4x128xi1>, vector<4x128xf32>
    %27 = arith.addf %20, %26 : vector<4x128xf32>
    %c0_5 = arith.constant 0 : index
    %c0_6 = arith.constant 0 : index
    %28 = vector.load %arg3[%c0_5, %c0_6] : memref<4x128xf32, #tpu.memory_space<vmem>>, vector<4x128xf32>
    tpu.vector_store %arg3[%c0_5, %c0_6], %27 {strides = array<i32>} : memref<4x128xf32, #tpu.memory_space<vmem>>, vector<4x128xf32>,
    return
  }
  func.func @transform_0(%arg0: i32) -> (i32, i32) {
    %c0_i32 = arith.constant 0 : i32
    %c0_i32_0 = arith.constant 0 : i32
    return %arg0, %c0_i32 : i32, i32
  }
  func.func @transform_1(%arg0: i32) -> (i32, i32) {
    %c0_i32 = arith.constant 0 : i32
    %c0_i32_0 = arith.constant 0 : i32
    %c0_i32_1 = arith.constant 0 : i32
    return %c0_i32, %c0_i32_0 : i32, i32
  }
  func.func @transform_2(%arg0: i32) -> (i32, i32) {
    %c0_i32 = arith.constant 0 : i32
    %c0_i32_0 = arith.constant 0 : i32
    return %arg0, %c0_i32 : i32, i32
  }
}

</mosaic_0001>

<llo_original>
// kernel: tpu_custom_call.1
$region0: #{tpu_custom_call.1}
  #allocation0 [shape = 'u32[]', space=smem, size = 0x4, offset = 0x4, fixed_abs, tag = 'smem constant byte address 0x4 - core index']
  #allocation1 [shape = 'u32[72,128]{1,0:T(1,128)}', space=vmem, size = 0x9000, scoped, tag = 'internal scratch']
  %s0 = inlined_call_operand.hbm [shape: f32[4,128], index: 0, kind: input, shape index: {}]
  %s1 = inlined_call_operand.hbm [shape: f32[6,128], index: 1, kind: input, shape index: {}]
  %s2 = inlined_call_operand.hbm [shape: f32[4,128], index: 2, kind: output, shape index: {}]
  %s3 = sld [smem:[#allocation0]]
  $region26: #{tpu_custom_call.1} parent=0
    _
  %s5 = ssub.s32 1, %s3
  %s6 = scalar_select 0, %s5, %s3
  $region1: #{tpu_custom_call.1} parent=0
    #allocation2 [shape = 'u8[2048]{0}', space=vmem, size = 0x800, scoped, tag = 'input window, operand 0, single buffered']
    #allocation3 [shape = 's32[1]{0}', space=sflag, size = 0x4, scoped, tag = 'scoped memory for tpu_custom_call.1']
    #allocation4 [shape = 's32[1]{0}', space=sflag, size = 0x4, scoped, tag = 'scoped memory for tpu_custom_call.1']
    #allocation5 [shape = 'u8[4096]{0}', space=vmem, size = 0x1000, scoped, tag = 'input window, operand 1, single buffered']
    #allocation6 [shape = 's32[1]{0}', space=sflag, size = 0x4, scoped, tag = 'scoped memory for tpu_custom_call.1']
    #allocation7 [shape = 'u8[2048]{0}', space=vmem, size = 0x800, scoped, tag = 'output window, operand 0, single buffered']
    %7 = vsyncpa [#allocation3], 0
    %8 = vsyncpa [#allocation6], 0
    %9 = vsyncpa [#allocation4], 0
    // Predicated region
    $region2: #{tpu_custom_call.1} parent=1 // pred_check
      _
    $region3: #{tpu_custom_call.1} parent=1 // pred_check_branch
      %11 = sbr.rel (0) target = $region5
    $region4: #{tpu_custom_call.1} parent=1 // pred_region
      %13 = vsyncadd [#allocation3], 0
      %s15 = sshll.u32 %s0, 4
      %s16 = int_to_ptr.hbm [resolvable:$true] %s15
      %s17 = sshll.u32 [#allocation2], 4
      %s18 = int_to_ptr.vmem [resolvable:$true] %s17
      %20 = dma.hbm_to_vmem [thread:$0]  %s16, 64, %s18, [#allocation3]
    $region5: #{tpu_custom_call.1} parent=1 // pred_fallthru
      _
    // Predicated region
    $region6: #{tpu_custom_call.1} parent=1 // pred_check
      _
    $region7: #{tpu_custom_call.1} parent=1 // pred_check_branch
      %22 = sbr.rel (0) target = $region9
    $region8: #{tpu_custom_call.1} parent=1 // pred_region
      %24 = vsyncadd [#allocation6], 0
      %s26 = sshll.u32 %s1, 4
      %s27 = int_to_ptr.hbm [resolvable:$true] %s26
      %s28 = sshll.u32 [#allocation5], 4
      %s29 = int_to_ptr.vmem [resolvable:$true] %s28
      %31 = dma.hbm_to_vmem [thread:$0]  %s27, 128, %s29, [#allocation6]
    $region9: #{tpu_custom_call.1} parent=1 // pred_fallthru
      _
    // Predicated region
    $region10: #{tpu_custom_call.1} parent=1 // pred_check
      _
    $region11: #{tpu_custom_call.1} parent=1 // pred_check_branch
      %33 = sbr.rel (0) target = $region13
    $region12: #{tpu_custom_call.1} parent=1 // pred_region
      %35 = dma.done [#allocation3], 64
    $region13: #{tpu_custom_call.1} parent=1 // pred_fallthru
      _
    // Predicated region
    $region14: #{tpu_custom_call.1} parent=1 // pred_check
      _
    $region15: #{tpu_custom_call.1} parent=1 // pred_check_branch
      %37 = sbr.rel (0) target = $region17
    $region16: #{tpu_custom_call.1} parent=1 // pred_region
      %39 = dma.done [#allocation6], 128
    $region17: #{tpu_custom_call.1} parent=1 // pred_fallthru
      _
    %v40 = vld [vmem:[#allocation2] sm:$0xf]
    %v41 = vld [vmem:[#allocation5] sm:$0x3f]
    %v42 = vperm.slane %v41, 3
    %vm43 = vcmp.gt.f32.partialorder %v40, %v42
    %v44 = vperm.slane %v41, 0
    %v45 = vsel %vm43, %v44, 0.0
    %v46 = vperm.slane %v41, 4
    %vm47 = vcmp.gt.f32.partialorder %v40, %v46
    %v48 = vperm.slane %v41, 1
    %v49 = vsel %vm47, %v48, 0.0
    %v50 = vadd.f32 %v45, %v49
    %v51 = vperm.slane %v41, 5
    %vm52 = vcmp.gt.f32.partialorder %v40, %v51
    %v53 = vperm.slane %v41, 2
    %v54 = vsel %vm52, %v53, 0.0
    %v55 = vadd.f32 %v50, %v54
    %56 = vst [vmem:[#allocation7] sm:$0xf] %v55
    // Predicated region
    $region18: #{tpu_custom_call.1} parent=1 // pred_check
      _
    $region19: #{tpu_custom_call.1} parent=1 // pred_check_branch
      %58 = sbr.rel (0) target = $region21
    $region20: #{tpu_custom_call.1} parent=1 // pred_region
      %60 = vsyncadd [#allocation4], 0
      %s62 = sshll.u32 [#allocation7], 4
      %s63 = int_to_ptr.vmem [resolvable:$true] %s62
      %s64 = sshll.u32 %s2, 4
      %s65 = int_to_ptr.hbm [resolvable:$true] %s64
      %67 = dma.vmem_to_hbm [thread:$0]  %s63, 64, %s65, [#allocation4]
    $region21: #{tpu_custom_call.1} parent=1 // pred_fallthru
      _
    // Predicated region
    $region22: #{tpu_custom_call.1} parent=1 // pred_check
      _
    $region23: #{tpu_custom_call.1} parent=1 // pred_check_branch
      %69 = sbr.rel (0) target = $region25
    $region24: #{tpu_custom_call.1} parent=1 // pred_region
      %71 = dma.done [#allocation4], 64
    $region25: #{tpu_custom_call.1} parent=1 // pred_fallthru
      _
    %72 = vsyncpa [#allocation3], 1
    %73 = vsyncpa [#allocation6], 1
    %74 = vsyncpa [#allocation4], 1

</llo_original>
